<compile_context>
chip_gen: v7x
topology: tpu7x:2x2x1
jax: 0.10.0
libtpu: 0.0.40
codegen_flags: <defaults>
</compile_context>

<pallas_src>
import jax
import jax.numpy as jnp
from jax import lax
from jax.experimental import pallas as pl
from jax.experimental.pallas import tpu as pltpu


def _mlp_kernel(x_ref, w1_ref, b1_ref, w2_ref, b2_ref, w3_ref, b3_ref, o_ref):
    # x_ref:  (TB, F)   f32  (cast to bf16 in-kernel)
    # w1_ref: (F, 128)  bf16    b1_ref: (1, 128) f32
    # w2_ref: (128, 64) bf16    b2_ref: (1, 64)  f32
    # w3_ref: (1, 64)   bf16    b3_ref: (1, 1)   f32
    # o_ref:  (1, TB)   f32   (lane-dense output row for this batch tile)

    # In-kernel bf16 cast of the streamed activation tile (saves a wrapper pass).
    xb = x_ref[...].astype(jnp.bfloat16)

    # Layer 1: (TB, F) @ (F, 128) -> ReLU   (bf16 operands, f32 accumulate)
    h1 = jnp.dot(xb, w1_ref[...], preferred_element_type=jnp.float32)
    h1 = jnp.maximum(h1 + b1_ref[...], 0.0)

    # Layer 2: (TB, 128) @ (128, 64) -> ReLU
    h2 = jnp.dot(h1.astype(jnp.bfloat16), w2_ref[...],
                 preferred_element_type=jnp.float32)
    h2 = jnp.maximum(h2 + b2_ref[...], 0.0)

    # Layer 3 on the MXU: (1, 64) x (TB, 64) contracted over 64 -> (1, TB),
    # already lane-dense (no XLU relayout needed).
    z3 = lax.dot_general(
        w3_ref[...], h2.astype(jnp.bfloat16),
        dimension_numbers=(((1,), (1,)), ((), ())),
        preferred_element_type=jnp.float32)
    z3 = z3 + b3_ref[...]                     # (1, TB) + (1, 1)

    o_ref[...] = jax.nn.sigmoid(z3).astype(o_ref.dtype)


def _round_up(n, m):
    return ((n + m - 1) // m) * m


def _vmem_estimate_bytes(tb, f):
    x_tiles = 2 * tb * f * 4                          # double-buffered f32 x tile
    weights = (f * 128 + 128 * 64 + 64) * 2 + (128 + 64 + 1) * 4
    inter = tb * (128 + 64) * 4 + tb * (128 + 64) * 2  # h1/h2 f32 + bf16 copies
    out = 2 * tb * 4                                   # double-buffered out row
    return x_tiles + weights + inter + out


def fraud_detection_forward(x, params, *, block_rows=2048):
    """x: (B, input_size) float32. params: dict of w1,b1,w2,b2,w3,b3.

    Returns sigmoid scores of shape (B, 1) float32.
    """
    B, F = x.shape

    # bf16 weights for the MXU layers (tiny one-off casts); f32 biases.
    w1 = params["w1"].astype(jnp.bfloat16)                  # (F, 128)
    w2 = params["w2"].astype(jnp.bfloat16)                  # (128, 64)
    w3 = params["w3"].reshape(1, -1).astype(jnp.bfloat16)   # (1, 64)
    b1 = params["b1"].astype(jnp.float32)                   # (1, 128)
    b2 = params["b2"].astype(jnp.float32)                   # (1, 64)
    b3 = params["b3"].astype(jnp.float32)                   # (1, 1)

    # Clamp the batch tile to the (sublane-rounded) batch so small/latency-path
    # batches don't burn work on padding; keep it a multiple of 8.
    TB = min(_round_up(block_rows, 8), _round_up(B, 8))
    num_tiles = pl.cdiv(B, TB)
    B_pad = num_tiles * TB

    x_in = x.astype(jnp.float32)
    if B_pad != B:
        # Only when B doesn't divide into tiles; bf16 cast itself stays in-kernel.
        x_in = jnp.pad(x_in, ((0, B_pad - B), (0, 0)))

    vmem_limit = int(min(max(4 * _vmem_estimate_bytes(TB, F), 32 << 20), 56 << 20))

    out = pl.pallas_call(
        _mlp_kernel,
        out_shape=jax.ShapeDtypeStruct((num_tiles, TB), jnp.float32),
        grid=(num_tiles,),
        in_specs=[
            # x: streamed per batch tile (double-buffered by Pallas).
            pl.BlockSpec((TB, F), lambda i: (i, 0)),
            # Weights / biases: constant index_map -> VMEM-resident across steps.
            pl.BlockSpec(w1.shape, lambda i: (0, 0)),
            pl.BlockSpec(b1.shape, lambda i: (0, 0)),
            pl.BlockSpec(w2.shape, lambda i: (0, 0)),
            pl.BlockSpec(b2.shape, lambda i: (0, 0)),
            pl.BlockSpec(w3.shape, lambda i: (0, 0)),
            pl.BlockSpec(b3.shape, lambda i: (0, 0)),
        ],
        # Lane-dense output slab: one (1, TB) row per grid step.
        out_specs=pl.BlockSpec((1, TB), lambda i: (i, 0)),
        compiler_params=pltpu.CompilerParams(
            dimension_semantics=("parallel",),
            vmem_limit_bytes=vmem_limit,
        ),
    )(x_in, w1, b1, w2, b2, w3, b3)

    # Layout plumbing back to the PyTorch output shape (B, 1).
    return out.reshape(B_pad, 1)[:B]


def init_params(input_size, key):
    """Deterministic init mimicking nn.Linear's uniform(-1/sqrt(in), 1/sqrt(in))."""
    ks = jax.random.split(key, 6)

    def linear(kw, kb, fan_in, fan_out):
        bound = 1.0 / jnp.sqrt(float(fan_in))
        w = jax.random.uniform(kw, (fan_in, fan_out), jnp.float32, -bound, bound)
        b = jax.random.uniform(kb, (1, fan_out), jnp.float32, -bound, bound)
        return w, b

    w1, b1 = linear(ks[0], ks[1], input_size, 128)
    w2, b2 = linear(ks[2], ks[3], 128, 64)
    w3, b3 = linear(ks[4], ks[5], 64, 1)
    return {"w1": w1, "b1": b1, "w2": w2, "b2": b2, "w3": w3, "b3": b3}


def reference_forward(x, p):
    """Precision-matched reference: bf16 operands for all three layers, f32 accumulate."""
    xb = x.astype(jnp.bfloat16)
    w1 = p["w1"].astype(jnp.bfloat16)
    w2 = p["w2"].astype(jnp.bfloat16)
    w3 = p["w3"].astype(jnp.bfloat16)
    h1 = jnp.maximum(
        jnp.dot(xb, w1, preferred_element_type=jnp.float32) + p["b1"], 0.0)
    h2 = jnp.maximum(
        jnp.dot(h1.astype(jnp.bfloat16), w2, preferred_element_type=jnp.float32)
        + p["b2"], 0.0)
    z3 = jnp.dot(h2.astype(jnp.bfloat16), w3,
                 preferred_element_type=jnp.float32) + p["b3"]
    return jax.nn.sigmoid(z3)


if __name__ == "__main__":
    key = jax.random.PRNGKey(0)
    k_x, k_p = jax.random.split(key)

    batch, input_size = 8, 32  # small synthetic fraud-feature batch
    x = jax.random.normal(k_x, (batch, input_size), jnp.float32)
    params = init_params(input_size, k_p)

    out = fraud_detection_forward(x, params)
    out = jax.block_until_ready(out)

    ref = reference_forward(x, params)
    assert out.shape == (batch, 1)
    assert jnp.all(jnp.isfinite(out))
    assert jnp.allclose(out, ref, atol=2e-3, rtol=2e-3)

    print("KERNEL_OK")
</pallas_src>

<mosaic_0001>
module attributes {stable_mosaic.version = 11 : i64} {
  func.func @_mlp_kernel(%arg0: i32, %arg1: memref<8x32xf32, #tpu.memory_space<vmem>>, %arg2: memref<32x128xbf16, #tpu.memory_space<vmem>>, %arg3: memref<1x128xf32, #tpu.memory_space<vmem>>, %arg4: memref<128x64xbf16, #tpu.memory_space<vmem>>, %arg5: memref<1x64xf32, #tpu.memory_space<vmem>>, %arg6: memref<1x64xbf16, #tpu.memory_space<vmem>>, %arg7: memref<1x1xf32, #tpu.memory_space<vmem>>, %arg8: memref<1x8xf32, #tpu.memory_space<vmem>>) attributes {dimension_semantics = [#tpu.dimension_semantics<parallel>], iteration_bounds = array<i64: 1>, scalar_prefetch = 0 : i64, scratch_operands = 0 : i64, tpu.core_type = #tpu.core_type<tc>, window_params = [{transform_indices = @transform_0, window_bounds = array<i64: 8, 32>}, {pipeline_mode = #tpu.pipeline_mode<synchronous>, transform_indices = @transform_1, window_bounds = array<i64: 32, 128>}, {pipeline_mode = #tpu.pipeline_mode<synchronous>, transform_indices = @transform_2, window_bounds = array<i64: 1, 128>}, {pipeline_mode = #tpu.pipeline_mode<synchronous>, transform_indices = @transform_3, window_bounds = array<i64: 128, 64>}, {pipeline_mode = #tpu.pipeline_mode<synchronous>, transform_indices = @transform_4, window_bounds = array<i64: 1, 64>}, {pipeline_mode = #tpu.pipeline_mode<synchronous>, transform_indices = @transform_5, window_bounds = array<i64: 1, 64>}, {pipeline_mode = #tpu.pipeline_mode<synchronous>, transform_indices = @transform_6, window_bounds = array<i64: 1, 1>}, {transform_indices = @transform_7, window_bounds = array<i64: 1, 8>}]} {
    %c0 = arith.constant 0 : index
    %c0_0 = arith.constant 0 : index
    %0 = vector.load %arg1[%c0, %c0_0] : memref<8x32xf32, #tpu.memory_space<vmem>>, vector<8x32xf32>
    %1 = arith.truncf %0 : vector<8x32xf32> to vector<8x32xbf16>
    %c0_1 = arith.constant 0 : index
    %c0_2 = arith.constant 0 : index
    %2 = vector.load %arg2[%c0_1, %c0_2] : memref<32x128xbf16, #tpu.memory_space<vmem>>, vector<32x128xbf16>
    %cst = arith.constant dense<0.000000e+00> : vector<8x128xf32>
    %3 = tpu.matmul %1, %2, %cst {dimension_numbers = #tpu.dot_dimension_numbers<[1], [0], [0], [1], [0, 0, 1, 1], [], []>} : vector<8x32xbf16>, vector<32x128xbf16>, vector<8x128xf32> -> vector<8x128xf32>
    %c0_3 = arith.constant 0 : index
    %c0_4 = arith.constant 0 : index
    %4 = vector.load %arg3[%c0_3, %c0_4] : memref<1x128xf32, #tpu.memory_space<vmem>>, vector<1x128xf32>
    %5 = vector.broadcast %4 : vector<1x128xf32> to vector<8x128xf32>
    %6 = arith.addf %3, %5 : vector<8x128xf32>
    %cst_5 = arith.constant 0.000000e+00 : f32
    %7 = vector.broadcast %cst_5 : f32 to vector<8x128xf32>
    %8 = arith.maximumf %6, %7 : vector<8x128xf32>
    %9 = arith.truncf %8 : vector<8x128xf32> to vector<8x128xbf16>
    %c0_6 = arith.constant 0 : index
    %c0_7 = arith.constant 0 : index
    %10 = vector.load %arg4[%c0_6, %c0_7] : memref<128x64xbf16, #tpu.memory_space<vmem>>, vector<128x64xbf16>
    %cst_8 = arith.constant dense<0.000000e+00> : vector<8x64xf32>
    %11 = tpu.matmul %9, %10, %cst_8 {dimension_numbers = #tpu.dot_dimension_numbers<[1], [0], [0], [1], [0, 0, 1, 1], [], []>} : vector<8x128xbf16>, vector<128x64xbf16>, vector<8x64xf32> -> vector<8x64xf32>
    %c0_9 = arith.constant 0 : index
    %c0_10 = arith.constant 0 : index
    %12 = vector.load %arg5[%c0_9, %c0_10] : memref<1x64xf32, #tpu.memory_space<vmem>>, vector<1x64xf32>
    %13 = vector.broadcast %12 : vector<1x64xf32> to vector<8x64xf32>
    %14 = arith.addf %11, %13 : vector<8x64xf32>
    %cst_11 = arith.constant 0.000000e+00 : f32
    %15 = vector.broadcast %cst_11 : f32 to vector<8x64xf32>
    %16 = arith.maximumf %14, %15 : vector<8x64xf32>
    %c0_12 = arith.constant 0 : index
    %c0_13 = arith.constant 0 : index
    %17 = vector.load %arg6[%c0_12, %c0_13] : memref<1x64xbf16, #tpu.memory_space<vmem>>, vector<1x64xbf16>
    %18 = arith.truncf %16 : vector<8x64xf32> to vector<8x64xbf16>
    %cst_14 = arith.constant dense<0.000000e+00> : vector<1x8xf32>
    %19 = tpu.matmul %17, %18, %cst_14 {dimension_numbers = #tpu.dot_dimension_numbers<[1], [1], [0], [0], [0, 0, 1, 0], [], []>} : vector<1x64xbf16>, vector<8x64xbf16>, vector<1x8xf32> -> vector<1x8xf32>
    %c0_15 = arith.constant 0 : index
    %c0_16 = arith.constant 0 : index
    %20 = vector.load %arg7[%c0_15, %c0_16] : memref<1x1xf32, #tpu.memory_space<vmem>>, vector<1x1xf32>
    %21 = vector.broadcast %20 : vector<1x1xf32> to vector<1x8xf32>
    %22 = arith.addf %19, %21 : vector<1x8xf32>
    %23 = arith.negf %22 : vector<1x8xf32>
    %24 = math.exp %23 : vector<1x8xf32>
    %cst_17 = arith.constant 1.000000e+00 : f32
    %25 = vector.broadcast %cst_17 : f32 to vector<1x8xf32>
    %26 = arith.addf %25, %24 : vector<1x8xf32>
    %27 = arith.divf %25, %26 : vector<1x8xf32>
    %c0_18 = arith.constant 0 : index
    %c0_19 = arith.constant 0 : index
    %28 = vector.load %arg8[%c0_18, %c0_19] : memref<1x8xf32, #tpu.memory_space<vmem>>, vector<1x8xf32>
    tpu.vector_store %arg8[%c0_18, %c0_19], %27 {strides = array<i32>} : memref<1x8xf32, #tpu.memory_space<vmem>>, vector<1x8xf32>,
    return
  }
  func.func @transform_0(%arg0: i32) -> (i32, i32) {
    %c0_i32 = arith.constant 0 : i32
    %c0_i32_0 = arith.constant 0 : i32
    return %arg0, %c0_i32 : i32, i32
  }
  func.func @transform_1(%arg0: i32) -> (i32, i32) {
    %c0_i32 = arith.constant 0 : i32
    %c0_i32_0 = arith.constant 0 : i32
    %c0_i32_1 = arith.constant 0 : i32
    return %c0_i32, %c0_i32_0 : i32, i32
  }
  func.func @transform_2(%arg0: i32) -> (i32, i32) {
    %c0_i32 = arith.constant 0 : i32
    %c0_i32_0 = arith.constant 0 : i32
    %c0_i32_1 = arith.constant 0 : i32
    return %c0_i32, %c0_i32_0 : i32, i32
  }
  func.func @transform_3(%arg0: i32) -> (i32, i32) {
    %c0_i32 = arith.constant 0 : i32
    %c0_i32_0 = arith.constant 0 : i32
    %c0_i32_1 = arith.constant 0 : i32
    return %c0_i32, %c0_i32_0 : i32, i32
  }
  func.func @transform_4(%arg0: i32) -> (i32, i32) {
    %c0_i32 = arith.constant 0 : i32
    %c0_i32_0 = arith.constant 0 : i32
    %c0_i32_1 = arith.constant 0 : i32
    return %c0_i32, %c0_i32_0 : i32, i32
  }
  func.func @transform_5(%arg0: i32) -> (i32, i32) {
    %c0_i32 = arith.constant 0 : i32
    %c0_i32_0 = arith.constant 0 : i32
    %c0_i32_1 = arith.constant 0 : i32
    return %c0_i32, %c0_i32_0 : i32, i32
  }
  func.func @transform_6(%arg0: i32) -> (i32, i32) {
    %c0_i32 = arith.constant 0 : i32
    %c0_i32_0 = arith.constant 0 : i32
    %c0_i32_1 = arith.constant 0 : i32
    return %c0_i32, %c0_i32_0 : i32, i32
  }
  func.func @transform_7(%arg0: i32) -> (i32, i32) {
    %c0_i32 = arith.constant 0 : i32
    %c0_i32_0 = arith.constant 0 : i32
    return %arg0, %c0_i32 : i32, i32
  }
}

</mosaic_0001>

<llo_original>
// kernel: tpu_custom_call.1
$region0: #{tpu_custom_call.1}
  #allocation0 [shape = 'u32[]', space=smem, size = 0x4, offset = 0x4, fixed_abs, tag = 'smem constant byte address 0x4 - core index']
  #allocation1 [shape = 'u32[144,128]{1,0:T(1,128)}', space=vmem, size = 0x12000, scoped, tag = 'internal scratch']
  #allocation2 [shape = 'f32[1,1]{1,0:T(1,128)S(1)}', space=vmem, size = 0x200, scoped, tag = 'scoped memory for tpu_custom_call.1']
  %s0 = inlined_call_operand.vmem [shape: f32[8,32], index: 0, kind: input, shape index: {}]
  %s1 = inlined_call_operand.vmem [shape: bf16[32,128], index: 1, kind: input, shape index: {}]
  %s2 = inlined_call_operand.vmem [shape: f32[1,128], index: 2, kind: input, shape index: {}]
  %s3 = inlined_call_operand.vmem [shape: bf16[128,64], index: 3, kind: input, shape index: {}]
  %s4 = inlined_call_operand.vmem [shape: f32[1,64], index: 4, kind: input, shape index: {}]
  %s5 = inlined_call_operand.vmem [shape: bf16[1,64], index: 5, kind: input, shape index: {}]
  %s6 = inlined_call_operand.<no memory space> [shape: f32[1,1], index: 6, kind: input, shape index: {}]
  %s7 = inlined_call_operand.hbm [shape: f32[1,8], index: 7, kind: output, shape index: {}]
  %s8 = sld [smem:[#allocation0]]
  $region38: #{tpu_custom_call.1} parent=0
    _
  %s10 = ssub.s32 1, %s8
  %s11 = scalar_select 0, %s10, %s8
  %v12 = vstv %s6
  %13 = vst [vmem:[#allocation2] sm:$0x1] %v12
  $region1: #{tpu_custom_call.1} parent=0
    #allocation3 [shape = 'u8[512]{0}', space=vmem, size = 0x400, scoped, tag = 'output window, operand 0, single buffered']
    #allocation4 [shape = 's32[1]{0}', space=sflag, size = 0x4, scoped, tag = 'scoped memory for tpu_custom_call.1']
    %14 = vsyncpa [#allocation4], 0
    // Predicated region
    $region2: #{tpu_custom_call.1} parent=1 // pred_check
      _
    $region3: #{tpu_custom_call.1} parent=1 // pred_check_branch
      %16 = sbr.rel (0) target = $region5
    $region4: #{tpu_custom_call.1} parent=1 // pred_region
      _
    $region5: #{tpu_custom_call.1} parent=1 // pred_fallthru
      _
    // Predicated region
    $region6: #{tpu_custom_call.1} parent=1 // pred_check
      _
    $region7: #{tpu_custom_call.1} parent=1 // pred_check_branch
      %18 = sbr.rel (0) target = $region9
    $region8: #{tpu_custom_call.1} parent=1 // pred_region
      _
    $region9: #{tpu_custom_call.1} parent=1 // pred_fallthru
      _
    // Predicated region
    $region10: #{tpu_custom_call.1} parent=1 // pred_check
      _
    $region11: #{tpu_custom_call.1} parent=1 // pred_check_branch
      %20 = sbr.rel (0) target = $region13
    $region12: #{tpu_custom_call.1} parent=1 // pred_region
      _
    $region13: #{tpu_custom_call.1} parent=1 // pred_fallthru
      _
    // Predicated region
    $region14: #{tpu_custom_call.1} parent=1 // pred_check
      _
    $region15: #{tpu_custom_call.1} parent=1 // pred_check_branch
      %22 = sbr.rel (0) target = $region17
    $region16: #{tpu_custom_call.1} parent=1 // pred_region
      _
    $region17: #{tpu_custom_call.1} parent=1 // pred_fallthru
      _
    // Predicated region
    $region18: #{tpu_custom_call.1} parent=1 // pred_check
      _
    $region19: #{tpu_custom_call.1} parent=1 // pred_check_branch
      %24 = sbr.rel (0) target = $region21
    $region20: #{tpu_custom_call.1} parent=1 // pred_region
      _
    $region21: #{tpu_custom_call.1} parent=1 // pred_fallthru
      _
    // Predicated region
    $region22: #{tpu_custom_call.1} parent=1 // pred_check
      _
    $region23: #{tpu_custom_call.1} parent=1 // pred_check_branch
      %26 = sbr.rel (0) target = $region25
    $region24: #{tpu_custom_call.1} parent=1 // pred_region
      _
    $region25: #{tpu_custom_call.1} parent=1 // pred_fallthru
      _
    // Predicated region
    $region26: #{tpu_custom_call.1} parent=1 // pred_check
      _
    $region27: #{tpu_custom_call.1} parent=1 // pred_check_branch
      %28 = sbr.rel (0) target = $region29
    $region28: #{tpu_custom_call.1} parent=1 // pred_region
      _
    $region29: #{tpu_custom_call.1} parent=1 // pred_fallthru
      _
    %v30 = vld [vmem:[%s0] sm:$0xff]
    %v31 = vpack.c.bf16 %v30, %v30
    %v32 = vld [vmem:[%s1] sm:$0xf]
    %v33 = vld [vmem:[%s1 + $0x4] sm:$0xf]
    %v34 = vld [vmem:[%s1 + $0x8] sm:$0xf]
    %v35 = vld [vmem:[%s1 + $0xc] sm:$0xf]
    %v36 = vld [vmem:[%s2] sm:$0x1]
    %v38 = vlaneseq
    %v39 = vshrl.u32 %v38, 7
    %v40 = vsub.s32 0, %v39
    %v41 = vrot.slane %v36, %v40
    %v47 = vunpack.c.l.b16 %v32
    %v48 = vunpack.c.l.b16 %v33
    %v49 = vunpack.c.l.b16 %v34
    %v50 = vunpack.c.l.b16 %v35
    %v51 = vpack.c.b16 %v48, %v47
    %v52 = vpack.c.b16 %v50, %v49
    %vm55 = vcmask 261120
    %v57 = vsel %vm55, %v31, 0
    %59 = vmatprep.subr.bf16.mxu0 0
    %60 = vmatpush1.bf16.msra.mxu0 %v51
    %61 = vmatprep.subr.bf16.mxu0 0
    %62 = vmatpush1.bf16.msra.mxu0 %v52
    %63 = vmatprep.subr.bf16.mxu0 0
    %64 = vmatpush1.bf16.msra.mxu0 0
    %65 = vmatprep.subr.bf16.mxu0 0
    %66 = vmatpush1.bf16.msra.mxu0 0
    %67 = vmatprep.subr.bf16.mxu0 0
    %68 = vmatpush1.bf16.msra.mxu0 0
    %69 = vmatprep.subr.bf16.mxu0 0
    %70 = vmatpush1.bf16.msra.mxu0 0
    %71 = vmatprep.subr.bf16.mxu0 0
    %72 = vmatpush1.bf16.msra.mxu0 0
    %73 = vmatprep.subr.bf16.mxu0 0
    %74 = vmatpush1.bf16.msra.mxu0 0
    %75 = vmatprep.subr.bf16.mxu0 0
    %76 = vmatpush1.bf16.msra.mxu0 0
    %77 = vmatprep.subr.bf16.mxu0 0
    %78 = vmatpush1.bf16.msra.mxu0 0
    %79 = vmatprep.subr.bf16.mxu0 0
    %80 = vmatpush1.bf16.msra.mxu0 0
    %81 = vmatprep.subr.bf16.mxu0 0
    %82 = vmatpush1.bf16.msra.mxu0 0
    %83 = vmatprep.subr.bf16.mxu0 0
    %84 = vmatpush1.bf16.msra.mxu0 0
    %85 = vmatprep.subr.bf16.mxu0 0
    %86 = vmatpush1.bf16.msra.mxu0 0
    %87 = vmatprep.subr.bf16.mxu0 0
    %88 = vmatpush1.bf16.msra.mxu0 0
    %89 = vmatprep.subr.bf16.mxu0 0
    %90 = vmatpush1.bf16.msra.mxu0 0
    %91 = vmatprep.mubr.bf16.mxu0 0
    %92 = vmatmul.mubr.bf16.gmra.mrb[0].mxu0 %v57
    %v93 = vpop.f32.mrb[0].mxu0
    %v94 = vadd.f32 %v41, %v93
    %v95 = vpop.f32.mrb[0].mxu0
    %v96 = vpop.f32.mrb[0].mxu0
    %v97 = vpop.f32.mrb[0].mxu0
    %98 = vdwg.mxu0
    %v99 = vmax.f32 %v94, 0.0
    %v100 = vpack.c.bf16 %v99, %v99
    %v101 = vld [vmem:[%s3] sm:$0xf]
    %v102 = vld [vmem:[%s3 + $0x4] sm:$0xf]
    %v103 = vld [vmem:[%s3 + $0x8] sm:$0xf]
    %v104 = vld [vmem:[%s3 + $0xc] sm:$0xf]
    %v105 = vld [vmem:[%s3 + $0x10] sm:$0xf]
    %v106 = vld [vmem:[%s3 + $0x14] sm:$0xf]
    %v107 = vld [vmem:[%s3 + $0x18] sm:$0xf]
    %v108 = vld [vmem:[%s3 + $0x1c] sm:$0xf]
    %v109 = vld [vmem:[%s3 + $0x20] sm:$0xf]
    %v110 = vld [vmem:[%s3 + $0x24] sm:$0xf]
    %v111 = vld [vmem:[%s3 + $0x28] sm:$0xf]
    %v112 = vld [vmem:[%s3 + $0x2c] sm:$0xf]
    %v113 = vld [vmem:[%s3 + $0x30] sm:$0xf]
    %v114 = vld [vmem:[%s3 + $0x34] sm:$0xf]
    %v115 = vld [vmem:[%s3 + $0x38] sm:$0xf]
    %v116 = vld [vmem:[%s3 + $0x3c] sm:$0xf]
    %v117 = vld [vmem:[%s4] sm:$0x1]
    %v119 = vlaneseq
    %v120 = vshrl.u32 %v119, 7
    %v121 = vsub.s32 0, %v120
    %v122 = vrot.slane %v117, %v121
    %v140 = vunpack.c.l.b16 %v101
    %v141 = vunpack.c.l.b16 %v102
    %v142 = vunpack.c.l.b16 %v103
    %v143 = vunpack.c.l.b16 %v104
    %v144 = vunpack.c.l.b16 %v105
    %v145 = vunpack.c.l.b16 %v106
    %v146 = vunpack.c.l.b16 %v107
    %v147 = vunpack.c.l.b16 %v108
    %v148 = vunpack.c.l.b16 %v109
    %v149 = vunpack.c.l.b16 %v110
    %v150 = vunpack.c.l.b16 %v111
    %v151 = vunpack.c.l.b16 %v112
    %v152 = vunpack.c.l.b16 %v113
    %v153 = vunpack.c.l.b16 %v114
    %v154 = vunpack.c.l.b16 %v115
    %v155 = vunpack.c.l.b16 %v116
    %v156 = vpack.c.b16 %v141, %v140
    %v157 = vpack.c.b16 %v143, %v142
    %v158 = vpack.c.b16 %v145, %v144
    %v159 = vpack.c.b16 %v147, %v146
    %v160 = vpack.c.b16 %v149, %v148
    %v161 = vpack.c.b16 %v151, %v150
    %v162 = vpack.c.b16 %v153, %v152
    %v163 = vpack.c.b16 %v155, %v154
    %172 = vmatprep.subr.bf16.mxu0 0
    %173 = vmatpush1.bf16.msra.mxu0 %v156
    %174 = vmatprep.subr.bf16.mxu0 0
    %175 = vmatpush1.bf16.msra.mxu0 %v157
    %176 = vmatprep.subr.bf16.mxu0 0
    %177 = vmatpush1.bf16.msra.mxu0 %v158
    %178 = vmatprep.subr.bf16.mxu0 0
    %179 = vmatpush1.bf16.msra.mxu0 %v159
    %180 = vmatprep.subr.bf16.mxu0 0
    %181 = vmatpush1.bf16.msra.mxu0 %v160
    %182 = vmatprep.subr.bf16.mxu0 0
    %183 = vmatpush1.bf16.msra.mxu0 %v161
    %184 = vmatprep.subr.bf16.mxu0 0
    %185 = vmatpush1.bf16.msra.mxu0 %v162
    %186 = vmatprep.subr.bf16.mxu0 0
    %187 = vmatpush1.bf16.msra.mxu0 %v163
    %188 = vmatprep.subr.bf16.mxu0 0
    %189 = vmatpush1.bf16.msra.mxu0 0
    %190 = vmatprep.subr.bf16.mxu0 0
    %191 = vmatpush1.bf16.msra.mxu0 0
    %192 = vmatprep.subr.bf16.mxu0 0
    %193 = vmatpush1.bf16.msra.mxu0 0
    %194 = vmatprep.subr.bf16.mxu0 0
    %195 = vmatpush1.bf16.msra.mxu0 0
    %196 = vmatprep.subr.bf16.mxu0 0
    %197 = vmatpush1.bf16.msra.mxu0 0
    %198 = vmatprep.subr.bf16.mxu0 0
    %199 = vmatpush1.bf16.msra.mxu0 0
    %200 = vmatprep.subr.bf16.mxu0 0
    %201 = vmatpush1.bf16.msra.mxu0 0
    %202 = vmatprep.subr.bf16.mxu0 0
    %203 = vmatpush1.bf16.msra.mxu0 0
    %204 = vmatprep.mubr.bf16.mxu0 0
    %205 = vmatmul.mubr.bf16.gmra.mrb[0].mxu0 %v100
    %v206 = vpop.f32.mrb[0].mxu0
    %v207 = vadd.f32 %v122, %v206
    %v208 = vpop.f32.mrb[0].mxu0
    %v209 = vpop.f32.mrb[0].mxu0
    %v210 = vpop.f32.mrb[0].mxu0
    %211 = vdwg.mxu0
    %v212 = vmax.f32 %v207, 0.0
    %v213 = vld [vmem:[%s5] sm:$0x1]
    %v214 = vpack.c.bf16 %v212, %v212
    %v215 = vld [vmem:[#allocation2] sm:$0x1]
    %217 = vset.pattern.permute.xlu0 0
    %218 = vperm.xlu0 %217, %v215
    %v219 = vpop.permute.xlu0 %218
    %v221 = vlaneseq
    %v222 = vshrl.u32 %v221, 7
    %v223 = vsub.s32 0, %v222
    %v224 = vrot.slane %v219, %v223
    %vm225 = vcmask 523264
    %v227 = vsel %vm225, %v213, 0
    %v230 = vsel %vm225, %v214, 0
    %232 = vmatprep.subr.bf16.mxu0 0
    %233 = vmatpush1.bf16.xpose.msra.mxu0 %v230
    %234 = vmatprep.subr.bf16.mxu0 0
    %235 = vmatpush1.bf16.xpose.msra.mxu0 0
    %236 = vmatprep.subr.bf16.mxu0 0
    %237 = vmatpush1.bf16.xpose.msra.mxu0 0
    %238 = vmatprep.subr.bf16.mxu0 0
    %239 = vmatpush1.bf16.xpose.msra.mxu0 0
    %240 = vmatprep.subr.bf16.mxu0 0
    %241 = vmatpush1.bf16.xpose.msra.mxu0 0
    %242 = vmatprep.subr.bf16.mxu0 0
    %243 = vmatpush1.bf16.xpose.msra.mxu0 0
    %244 = vmatprep.subr.bf16.mxu0 0
    %245 = vmatpush1.bf16.xpose.msra.mxu0 0
    %246 = vmatprep.subr.bf16.mxu0 0
    %247 = vmatpush1.bf16.xpose.msra.mxu0 0
    %248 = vmatprep.subr.bf16.mxu0 0
    %249 = vmatpush1.bf16.xpose.msra.mxu0 0
    %250 = vmatprep.subr.bf16.mxu0 0
    %251 = vmatpush1.bf16.xpose.msra.mxu0 0
    %252 = vmatprep.subr.bf16.mxu0 0
    %253 = vmatpush1.bf16.xpose.msra.mxu0 0
    %254 = vmatprep.subr.bf16.mxu0 0
    %255 = vmatpush1.bf16.xpose.msra.mxu0 0
    %256 = vmatprep.subr.bf16.mxu0 0
    %257 = vmatpush1.bf16.xpose.msra.mxu0 0
    %258 = vmatprep.subr.bf16.mxu0 0
    %259 = vmatpush1.bf16.xpose.msra.mxu0 0
    %260 = vmatprep.subr.bf16.mxu0 0
    %261 = vmatpush1.bf16.xpose.msra.mxu0 0
    %262 = vmatprep.subr.bf16.mxu0 0
    %263 = vmatpush1.bf16.xpose.msra.mxu0 0
    %264 = vmatprep.mubr.bf16.mxu0 0
    %265 = vmatmul.mubr.bf16.gmra.mrb[0].mxu0 %v227
    %v266 = vpop.f32.mrb[0].mxu0
    %v267 = vadd.f32 %v224, %v266
    %v268 = vpop.f32.mrb[0].mxu0
    %v269 = vpop.f32.mrb[0].mxu0
    %v270 = vpop.f32.mrb[0].mxu0
    %271 = vdwg.mxu0
    %v272 = vxor.u32 %v267, 2147483648
    %v273 = vmul.f32 %v272, 1.442695
    %v274 = vpow.pop %v273
    %v275 = vadd.f32 %v274, 1.0
    %v276 = vrcp.pop %v275
    %v277 = vmul.f32 1.0, %v276
    %vm278 = vcmask 57344
    %279 = vst.msk [vmem:[#allocation3] sm:$0x1] %vm278, %v277
    // Predicated region
    $region30: #{tpu_custom_call.1} parent=1 // pred_check
      _
    $region31: #{tpu_custom_call.1} parent=1 // pred_check_branch
      %281 = sbr.rel (0) target = $region33
    $region32: #{tpu_custom_call.1} parent=1 // pred_region
      %s283 = ssub.s32 16, 16
      %284 = vsyncadd [#allocation4], %s283
      %s286 = sshll.u32 [#allocation3], 4
      %s287 = int_to_ptr.vmem [resolvable:$true] %s286
      %289 = dma.vmem_to_hbm [thread:$0]  %s287, 16, %s7, [#allocation4]
    $region33: #{tpu_custom_call.1} parent=1 // pred_fallthru
      _
    // Predicated region
    $region34: #{tpu_custom_call.1} parent=1 // pred_check
      _
    $region35: #{tpu_custom_call.1} parent=1 // pred_check_branch
      %291 = sbr.rel (0) target = $region37
    $region36: #{tpu_custom_call.1} parent=1 // pred_region
      %292 = dma.done [#allocation4], 16
    $region37: #{tpu_custom_call.1} parent=1 // pred_fallthru
      _
    %293 = vsyncpa [#allocation4], 1

</llo_original>
